<compile_context>
chip_gen: v7x
topology: tpu7x:2x2x1
jax: 0.10.0
libtpu: 0.0.40
codegen_flags: <defaults>
</compile_context>

<pallas_src>
import jax
import jax.numpy as jnp
from jax.experimental import pallas as pl
from jax.experimental.pallas import tpu as pltpu


def _round_up(x, m):
    return (x + m - 1) // m * m


def mlp_kernel(x_ref, w0_ref, b0_ref, w1_ref, b1_ref,
               w2_ref, b2_ref, w3_ref, b3_ref, o_ref):
    """Feature-major fused MLP. All tiles are [features, batch_tile]."""
    xt = x_ref[...].astype(jnp.bfloat16)                                # [F, tb]

    h = jnp.dot(w0_ref[...], xt,
                preferred_element_type=jnp.float32) + b0_ref[...]      # [8, tb]
    h = jnp.maximum(h, 0.0)

    h = jnp.dot(w1_ref[...], h.astype(jnp.bfloat16),
                preferred_element_type=jnp.float32) + b1_ref[...]      # [16, tb]
    h = jnp.maximum(h, 0.0)

    h = jnp.dot(w2_ref[...], h.astype(jnp.bfloat16),
                preferred_element_type=jnp.float32) + b2_ref[...]      # [32, tb]
    h = jnp.maximum(h, 0.0)

    out = jnp.dot(w3_ref[...], h.astype(jnp.bfloat16),
                  preferred_element_type=jnp.float32) + b3_ref[...]    # [10, tb]

    # TODO(synk): training-mode Dropout(p=0.3) would use
    # pltpu.prng_seed(seed_ref[0] + pl.program_id(0)) + pltpu.prng_random_bits
    # and fold the 1/(1-p) scale into w3/b3; eval-mode dropout is the identity.
    o_ref[...] = out.astype(o_ref.dtype)


def mlp_forward(x, params, *, block_b=4096):
    """x: [B, F] float32. params: PyTorch-layout weights [out, in], biases [out, 1]."""
    B, F = x.shape
    w0, b0 = params["w0"], params["b0"]
    w1, b1 = params["w1"], params["b1"]
    w2, b2 = params["w2"], params["b2"]
    w3, b3 = params["w3"], params["b3"]
    out_dim = w3.shape[0]

    # bf16 matmul inputs (accumulation stays f32 inside the kernel).
    w0b, w1b, w2b, w3b = (w.astype(jnp.bfloat16) for w in (w0, w1, w2, w3))

    # Batch tile is the lane axis of every in-kernel tile -> multiple of 128.
    block_b = max(128, _round_up(block_b, 128))
    # Keep >= 2 grid steps when the batch allows it (v7x: 2 TensorCores).
    block_b = min(block_b, max(128, _round_up((B + 1) // 2, 128)))

    Bp = _round_up(B, block_b)
    grid = (Bp // block_b,)

    # Feature-major layout (layout plumbing; tiny HBM cost for these dims).
    xt = jnp.pad(x.T, ((0, 0), (0, Bp - B))) if Bp != B else x.T

    # Whole-array VMEM residency for the tiny weights/biases.
    vmem_resident = pl.BlockSpec(memory_space=pltpu.MemorySpace.VMEM)

    # Explicit per-step VMEM budget (v7x: 64 MiB physical, 32 MiB default scoped).
    bytes_per_step = (
        2 * F * block_b * 4             # double-buffered f32 x tile
        + F * block_b * 2               # bf16 cast of the x tile
        + 2 * 16 * block_b * 4          # double-buffered out tile (10 -> 16 sublanes)
        + (8 + 16 + 32) * block_b * 8   # f32 + bf16 intermediates (generous)
        + (1 << 20)                     # params + slack
    )
    vmem_limit = int(min(max(bytes_per_step, 4 << 20), 48 << 20))

    flops = 2 * Bp * (F * 8 + 8 * 16 + 16 * 32 + 32 * out_dim)
    param_bytes = sum(int(p.size) * p.dtype.itemsize
                      for p in (w0b, b0, w1b, b1, w2b, b2, w3b, b3))
    bytes_accessed = Bp * (F + out_dim) * 4 + param_bytes
    cost = pl.CostEstimate(flops=int(flops), transcendentals=0,
                           bytes_accessed=int(bytes_accessed))

    out_t = pl.pallas_call(
        mlp_kernel,
        out_shape=jax.ShapeDtypeStruct((out_dim, Bp), jnp.float32),
        grid_spec=pltpu.PrefetchScalarGridSpec(
            num_scalar_prefetch=0,
            grid=grid,
            in_specs=[
                pl.BlockSpec((F, block_b), lambda i: (0, i)),  # x^T tile over batch
                vmem_resident, vmem_resident,   # w0, b0
                vmem_resident, vmem_resident,   # w1, b1
                vmem_resident, vmem_resident,   # w2, b2
                vmem_resident, vmem_resident,   # w3, b3
            ],
            out_specs=pl.BlockSpec((out_dim, block_b), lambda i: (0, i)),
        ),
        compiler_params=pltpu.CompilerParams(
            dimension_semantics=("parallel",),
            vmem_limit_bytes=vmem_limit),
        cost_estimate=cost,
    )(xt, w0b, b0, w1b, b1, w2b, b2, w3b, b3)

    out = out_t.T                      # [Bp, out_dim]
    return out[:B] if Bp != B else out


def init_params(key, in_features):
    """Deterministic init mirroring nn.Linear: weights [out, in], biases [out, 1]."""
    dims = [(in_features, 8), (8, 16), (16, 32), (32, 10)]
    params = {}
    for idx, (fan_in, fan_out) in enumerate(dims):
        key, kw, kb = jax.random.split(key, 3)
        bound = 1.0 / jnp.sqrt(fan_in)
        params[f"w{idx}"] = jax.random.uniform(
            kw, (fan_out, fan_in), jnp.float32, -bound, bound)
        params[f"b{idx}"] = jax.random.uniform(
            kb, (fan_out, 1), jnp.float32, -bound, bound)
    return params


def reference_forward(x, params):
    h = jnp.maximum(x @ params["w0"].T + params["b0"][:, 0], 0.0)
    h = jnp.maximum(h @ params["w1"].T + params["b1"][:, 0], 0.0)
    h = jnp.maximum(h @ params["w2"].T + params["b2"][:, 0], 0.0)
    return h @ params["w3"].T + params["b3"][:, 0]


if __name__ == "__main__":
    key = jax.random.PRNGKey(0)
    in_features = 32

    kx1, kx2, kp = jax.random.split(key, 3)
    params = init_params(kp, in_features)

    # Case 1: small, non-aligned batch -> single-tile pad/slice path.
    x1 = jax.random.normal(kx1, (20, in_features), jnp.float32)
    out1 = jax.block_until_ready(mlp_forward(x1, params))
    ref1 = reference_forward(x1, params)
    assert out1.shape == (20, 10)
    # bf16 matmul inputs (f32 accumulation) -> relaxed tolerance vs f32 reference.
    assert jnp.allclose(out1, ref1, atol=3e-2, rtol=3e-2), "mismatch vs JAX reference (case 1)"

    # Case 2: multi-step pipelined grid (two 256-row tiles), exercises the
    # "parallel" grid axis used by v7x megacore sharding.
    x2 = jax.random.normal(kx2, (512, in_features), jnp.float32)
    out2 = jax.block_until_ready(mlp_forward(x2, params, block_b=256))
    ref2 = reference_forward(x2, params)
    assert out2.shape == (512, 10)
    assert jnp.allclose(out2, ref2, atol=3e-2, rtol=3e-2), "mismatch vs JAX reference (case 2)"

    print("KERNEL_OK")
</pallas_src>

<mosaic_0001>
module attributes {stable_mosaic.version = 11 : i64} {
  func.func @mlp_kernel(%arg0: i32, %arg1: memref<32x128xf32, #tpu.memory_space<vmem>>, %arg2: memref<8x32xbf16, #tpu.memory_space<vmem>>, %arg3: memref<8x1xf32, #tpu.memory_space<vmem>>, %arg4: memref<16x8xbf16, #tpu.memory_space<vmem>>, %arg5: memref<16x1xf32, #tpu.memory_space<vmem>>, %arg6: memref<32x16xbf16, #tpu.memory_space<vmem>>, %arg7: memref<32x1xf32, #tpu.memory_space<vmem>>, %arg8: memref<10x32xbf16, #tpu.memory_space<vmem>>, %arg9: memref<10x1xf32, #tpu.memory_space<vmem>>, %arg10: memref<10x128xf32, #tpu.memory_space<vmem>>) attributes {dimension_semantics = [#tpu.dimension_semantics<parallel>], iteration_bounds = array<i64: 1>, scalar_prefetch = 0 : i64, scratch_operands = 0 : i64, tpu.core_type = #tpu.core_type<tc>, window_params = [{transform_indices = @transform_0, window_bounds = array<i64: 32, 128>}, {pipeline_mode = #tpu.pipeline_mode<synchronous>, transform_indices = @transform_1, window_bounds = array<i64: 8, 32>}, {pipeline_mode = #tpu.pipeline_mode<synchronous>, transform_indices = @transform_2, window_bounds = array<i64: 8, 1>}, {pipeline_mode = #tpu.pipeline_mode<synchronous>, transform_indices = @transform_3, window_bounds = array<i64: 16, 8>}, {pipeline_mode = #tpu.pipeline_mode<synchronous>, transform_indices = @transform_4, window_bounds = array<i64: 16, 1>}, {pipeline_mode = #tpu.pipeline_mode<synchronous>, transform_indices = @transform_5, window_bounds = array<i64: 32, 16>}, {pipeline_mode = #tpu.pipeline_mode<synchronous>, transform_indices = @transform_6, window_bounds = array<i64: 32, 1>}, {pipeline_mode = #tpu.pipeline_mode<synchronous>, transform_indices = @transform_7, window_bounds = array<i64: 10, 32>}, {pipeline_mode = #tpu.pipeline_mode<synchronous>, transform_indices = @transform_8, window_bounds = array<i64: 10, 1>}, {transform_indices = @transform_9, window_bounds = array<i64: 10, 128>}]} {
    %c0 = arith.constant 0 : index
    %c0_0 = arith.constant 0 : index
    %0 = vector.load %arg1[%c0, %c0_0] : memref<32x128xf32, #tpu.memory_space<vmem>>, vector<32x128xf32>
    %1 = arith.truncf %0 : vector<32x128xf32> to vector<32x128xbf16>
    %c0_1 = arith.constant 0 : index
    %c0_2 = arith.constant 0 : index
    %2 = vector.load %arg2[%c0_1, %c0_2] : memref<8x32xbf16, #tpu.memory_space<vmem>>, vector<8x32xbf16>
    %cst = arith.constant dense<0.000000e+00> : vector<8x128xf32>
    %3 = tpu.matmul %2, %1, %cst {dimension_numbers = #tpu.dot_dimension_numbers<[1], [0], [0], [1], [0, 0, 1, 1], [], []>} : vector<8x32xbf16>, vector<32x128xbf16>, vector<8x128xf32> -> vector<8x128xf32>
    %c0_3 = arith.constant 0 : index
    %c0_4 = arith.constant 0 : index
    %4 = vector.load %arg3[%c0_3, %c0_4] : memref<8x1xf32, #tpu.memory_space<vmem>>, vector<8x1xf32>
    %5 = vector.broadcast %4 : vector<8x1xf32> to vector<8x128xf32>
    %6 = arith.addf %3, %5 : vector<8x128xf32>
    %cst_5 = arith.constant 0.000000e+00 : f32
    %7 = vector.broadcast %cst_5 : f32 to vector<8x128xf32>
    %8 = arith.maximumf %6, %7 : vector<8x128xf32>
    %c0_6 = arith.constant 0 : index
    %c0_7 = arith.constant 0 : index
    %9 = vector.load %arg4[%c0_6, %c0_7] : memref<16x8xbf16, #tpu.memory_space<vmem>>, vector<16x8xbf16>
    %10 = arith.truncf %8 : vector<8x128xf32> to vector<8x128xbf16>
    %cst_8 = arith.constant dense<0.000000e+00> : vector<16x128xf32>
    %11 = tpu.matmul %9, %10, %cst_8 {dimension_numbers = #tpu.dot_dimension_numbers<[1], [0], [0], [1], [0, 0, 1, 1], [], []>} : vector<16x8xbf16>, vector<8x128xbf16>, vector<16x128xf32> -> vector<16x128xf32>
    %c0_9 = arith.constant 0 : index
    %c0_10 = arith.constant 0 : index
    %12 = vector.load %arg5[%c0_9, %c0_10] : memref<16x1xf32, #tpu.memory_space<vmem>>, vector<16x1xf32>
    %13 = vector.broadcast %12 : vector<16x1xf32> to vector<16x128xf32>
    %14 = arith.addf %11, %13 : vector<16x128xf32>
    %cst_11 = arith.constant 0.000000e+00 : f32
    %15 = vector.broadcast %cst_11 : f32 to vector<16x128xf32>
    %16 = arith.maximumf %14, %15 : vector<16x128xf32>
    %c0_12 = arith.constant 0 : index
    %c0_13 = arith.constant 0 : index
    %17 = vector.load %arg6[%c0_12, %c0_13] : memref<32x16xbf16, #tpu.memory_space<vmem>>, vector<32x16xbf16>
    %18 = arith.truncf %16 : vector<16x128xf32> to vector<16x128xbf16>
    %cst_14 = arith.constant dense<0.000000e+00> : vector<32x128xf32>
    %19 = tpu.matmul %17, %18, %cst_14 {dimension_numbers = #tpu.dot_dimension_numbers<[1], [0], [0], [1], [0, 0, 1, 1], [], []>} : vector<32x16xbf16>, vector<16x128xbf16>, vector<32x128xf32> -> vector<32x128xf32>
    %c0_15 = arith.constant 0 : index
    %c0_16 = arith.constant 0 : index
    %20 = vector.load %arg7[%c0_15, %c0_16] : memref<32x1xf32, #tpu.memory_space<vmem>>, vector<32x1xf32>
    %21 = vector.broadcast %20 : vector<32x1xf32> to vector<32x128xf32>
    %22 = arith.addf %19, %21 : vector<32x128xf32>
    %cst_17 = arith.constant 0.000000e+00 : f32
    %23 = vector.broadcast %cst_17 : f32 to vector<32x128xf32>
    %24 = arith.maximumf %22, %23 : vector<32x128xf32>
    %c0_18 = arith.constant 0 : index
    %c0_19 = arith.constant 0 : index
    %25 = vector.load %arg8[%c0_18, %c0_19] : memref<10x32xbf16, #tpu.memory_space<vmem>>, vector<10x32xbf16>
    %26 = arith.truncf %24 : vector<32x128xf32> to vector<32x128xbf16>
    %cst_20 = arith.constant dense<0.000000e+00> : vector<10x128xf32>
    %27 = tpu.matmul %25, %26, %cst_20 {dimension_numbers = #tpu.dot_dimension_numbers<[1], [0], [0], [1], [0, 0, 1, 1], [], []>} : vector<10x32xbf16>, vector<32x128xbf16>, vector<10x128xf32> -> vector<10x128xf32>
    %c0_21 = arith.constant 0 : index
    %c0_22 = arith.constant 0 : index
    %28 = vector.load %arg9[%c0_21, %c0_22] : memref<10x1xf32, #tpu.memory_space<vmem>>, vector<10x1xf32>
    %29 = vector.broadcast %28 : vector<10x1xf32> to vector<10x128xf32>
    %30 = arith.addf %27, %29 : vector<10x128xf32>
    %c0_23 = arith.constant 0 : index
    %c0_24 = arith.constant 0 : index
    %31 = vector.load %arg10[%c0_23, %c0_24] : memref<10x128xf32, #tpu.memory_space<vmem>>, vector<10x128xf32>
    tpu.vector_store %arg10[%c0_23, %c0_24], %30 {strides = array<i32>} : memref<10x128xf32, #tpu.memory_space<vmem>>, vector<10x128xf32>,
    return
  }
  func.func @transform_0(%arg0: i32) -> (i32, i32) {
    %c0_i32 = arith.constant 0 : i32
    %c0_i32_0 = arith.constant 0 : i32
    return %c0_i32, %arg0 : i32, i32
  }
  func.func @transform_1(%arg0: i32) -> (i32, i32) {
    %c0_i32 = arith.constant 0 : i32
    %c0_i32_0 = arith.constant 0 : i32
    %c0_i32_1 = arith.constant 0 : i32
    return %c0_i32, %c0_i32_0 : i32, i32
  }
  func.func @transform_2(%arg0: i32) -> (i32, i32) {
    %c0_i32 = arith.constant 0 : i32
    %c0_i32_0 = arith.constant 0 : i32
    %c0_i32_1 = arith.constant 0 : i32
    return %c0_i32, %c0_i32_0 : i32, i32
  }
  func.func @transform_3(%arg0: i32) -> (i32, i32) {
    %c0_i32 = arith.constant 0 : i32
    %c0_i32_0 = arith.constant 0 : i32
    %c0_i32_1 = arith.constant 0 : i32
    return %c0_i32, %c0_i32_0 : i32, i32
  }
  func.func @transform_4(%arg0: i32) -> (i32, i32) {
    %c0_i32 = arith.constant 0 : i32
    %c0_i32_0 = arith.constant 0 : i32
    %c0_i32_1 = arith.constant 0 : i32
    return %c0_i32, %c0_i32_0 : i32, i32
  }
  func.func @transform_5(%arg0: i32) -> (i32, i32) {
    %c0_i32 = arith.constant 0 : i32
    %c0_i32_0 = arith.constant 0 : i32
    %c0_i32_1 = arith.constant 0 : i32
    return %c0_i32, %c0_i32_0 : i32, i32
  }
  func.func @transform_6(%arg0: i32) -> (i32, i32) {
    %c0_i32 = arith.constant 0 : i32
    %c0_i32_0 = arith.constant 0 : i32
    %c0_i32_1 = arith.constant 0 : i32
    return %c0_i32, %c0_i32_0 : i32, i32
  }
  func.func @transform_7(%arg0: i32) -> (i32, i32) {
    %c0_i32 = arith.constant 0 : i32
    %c0_i32_0 = arith.constant 0 : i32
    %c0_i32_1 = arith.constant 0 : i32
    return %c0_i32, %c0_i32_0 : i32, i32
  }
  func.func @transform_8(%arg0: i32) -> (i32, i32) {
    %c0_i32 = arith.constant 0 : i32
    %c0_i32_0 = arith.constant 0 : i32
    %c0_i32_1 = arith.constant 0 : i32
    return %c0_i32, %c0_i32_0 : i32, i32
  }
  func.func @transform_9(%arg0: i32) -> (i32, i32) {
    %c0_i32 = arith.constant 0 : i32
    %c0_i32_0 = arith.constant 0 : i32
    return %c0_i32, %arg0 : i32, i32
  }
}

</mosaic_0001>

<llo_original>
// kernel: tpu_custom_call.1
$region0: #{tpu_custom_call.1}
  #allocation0 [shape = 'u32[]', space=smem, size = 0x4, offset = 0x4, fixed_abs, tag = 'smem constant byte address 0x4 - core index']
  #allocation1 [shape = 'u32[144,128]{1,0:T(1,128)}', space=vmem, size = 0x12000, scoped, tag = 'internal scratch']
  %s0 = inlined_call_operand.vmem [shape: f32[32,128], index: 0, kind: input, shape index: {}]
  %s1 = inlined_call_operand.vmem [shape: bf16[8,32], index: 1, kind: input, shape index: {}]
  %s2 = inlined_call_operand.vmem [shape: f32[8,1], index: 2, kind: input, shape index: {}]
  %s3 = inlined_call_operand.vmem [shape: bf16[16,8], index: 3, kind: input, shape index: {}]
  %s4 = inlined_call_operand.vmem [shape: f32[16,1], index: 4, kind: input, shape index: {}]
  %s5 = inlined_call_operand.vmem [shape: bf16[32,16], index: 5, kind: input, shape index: {}]
  %s6 = inlined_call_operand.vmem [shape: f32[32,1], index: 6, kind: input, shape index: {}]
  %s7 = inlined_call_operand.vmem [shape: bf16[10,32], index: 7, kind: input, shape index: {}]
  %s8 = inlined_call_operand.vmem [shape: f32[10,1], index: 8, kind: input, shape index: {}]
  %s9 = inlined_call_operand.hbm [shape: f32[10,128], index: 9, kind: output, shape index: {}]
  %s10 = sld [smem:[#allocation0]]
  $region46: #{tpu_custom_call.1} parent=0
    _
  %s12 = ssub.s32 1, %s10
  %s13 = scalar_select 0, %s12, %s10
  $region1: #{tpu_custom_call.1} parent=0
    #allocation2 [shape = 'u8[8192]{0}', space=vmem, size = 0x2000, scoped, tag = 'output window, operand 0, single buffered']
    #allocation3 [shape = 's32[1]{0}', space=sflag, size = 0x4, scoped, tag = 'scoped memory for tpu_custom_call.1']
    %14 = vsyncpa [#allocation3], 0
    // Predicated region
    $region2: #{tpu_custom_call.1} parent=1 // pred_check
      _
    $region3: #{tpu_custom_call.1} parent=1 // pred_check_branch
      %16 = sbr.rel (0) target = $region5
    $region4: #{tpu_custom_call.1} parent=1 // pred_region
      _
    $region5: #{tpu_custom_call.1} parent=1 // pred_fallthru
      _
    // Predicated region
    $region6: #{tpu_custom_call.1} parent=1 // pred_check
      _
    $region7: #{tpu_custom_call.1} parent=1 // pred_check_branch
      %18 = sbr.rel (0) target = $region9
    $region8: #{tpu_custom_call.1} parent=1 // pred_region
      _
    $region9: #{tpu_custom_call.1} parent=1 // pred_fallthru
      _
    // Predicated region
    $region10: #{tpu_custom_call.1} parent=1 // pred_check
      _
    $region11: #{tpu_custom_call.1} parent=1 // pred_check_branch
      %20 = sbr.rel (0) target = $region13
    $region12: #{tpu_custom_call.1} parent=1 // pred_region
      _
    $region13: #{tpu_custom_call.1} parent=1 // pred_fallthru
      _
    // Predicated region
    $region14: #{tpu_custom_call.1} parent=1 // pred_check
      _
    $region15: #{tpu_custom_call.1} parent=1 // pred_check_branch
      %22 = sbr.rel (0) target = $region17
    $region16: #{tpu_custom_call.1} parent=1 // pred_region
      _
    $region17: #{tpu_custom_call.1} parent=1 // pred_fallthru
      _
    // Predicated region
    $region18: #{tpu_custom_call.1} parent=1 // pred_check
      _
    $region19: #{tpu_custom_call.1} parent=1 // pred_check_branch
      %24 = sbr.rel (0) target = $region21
    $region20: #{tpu_custom_call.1} parent=1 // pred_region
      _
    $region21: #{tpu_custom_call.1} parent=1 // pred_fallthru
      _
    // Predicated region
    $region22: #{tpu_custom_call.1} parent=1 // pred_check
      _
    $region23: #{tpu_custom_call.1} parent=1 // pred_check_branch
      %26 = sbr.rel (0) target = $region25
    $region24: #{tpu_custom_call.1} parent=1 // pred_region
      _
    $region25: #{tpu_custom_call.1} parent=1 // pred_fallthru
      _
    // Predicated region
    $region26: #{tpu_custom_call.1} parent=1 // pred_check
      _
    $region27: #{tpu_custom_call.1} parent=1 // pred_check_branch
      %28 = sbr.rel (0) target = $region29
    $region28: #{tpu_custom_call.1} parent=1 // pred_region
      _
    $region29: #{tpu_custom_call.1} parent=1 // pred_fallthru
      _
    // Predicated region
    $region30: #{tpu_custom_call.1} parent=1 // pred_check
      _
    $region31: #{tpu_custom_call.1} parent=1 // pred_check_branch
      %30 = sbr.rel (0) target = $region33
    $region32: #{tpu_custom_call.1} parent=1 // pred_region
      _
    $region33: #{tpu_custom_call.1} parent=1 // pred_fallthru
      _
    // Predicated region
    $region34: #{tpu_custom_call.1} parent=1 // pred_check
      _
    $region35: #{tpu_custom_call.1} parent=1 // pred_check_branch
      %32 = sbr.rel (0) target = $region37
    $region36: #{tpu_custom_call.1} parent=1 // pred_region
      _
    $region37: #{tpu_custom_call.1} parent=1 // pred_fallthru
      _
    %v34 = vld [vmem:[%s0] sm:$0xff]
    %v35 = vld [vmem:[%s0 + $0x8] sm:$0xff]
    %v36 = vld [vmem:[%s0 + $0x10] sm:$0xff]
    %v37 = vld [vmem:[%s0 + $0x18] sm:$0xff]
    %v38 = vpack.c.bf16 %v35, %v34
    %v39 = vpack.c.bf16 %v37, %v36
    %v40 = vld [vmem:[%s1] sm:$0xf]
    %v41 = vld [vmem:[%s2] sm:$0xff]
    %43 = vset.pattern.permute.xlu0 0
    %44 = vperm.xlu0 %43, %v41
    %v45 = vpop.permute.xlu0 %44
    %vm47 = vcmask 261120
    %v49 = vsel %vm47, %v40, 0
    %51 = vmatprep.subr.bf16.mxu0 0
    %52 = vmatpush1.bf16.msra.mxu0 %v38
    %53 = vmatprep.subr.bf16.mxu0 0
    %54 = vmatpush1.bf16.msra.mxu0 %v39
    %55 = vmatprep.subr.bf16.mxu0 0
    %56 = vmatpush1.bf16.msra.mxu0 0
    %57 = vmatprep.subr.bf16.mxu0 0
    %58 = vmatpush1.bf16.msra.mxu0 0
    %59 = vmatprep.subr.bf16.mxu0 0
    %60 = vmatpush1.bf16.msra.mxu0 0
    %61 = vmatprep.subr.bf16.mxu0 0
    %62 = vmatpush1.bf16.msra.mxu0 0
    %63 = vmatprep.subr.bf16.mxu0 0
    %64 = vmatpush1.bf16.msra.mxu0 0
    %65 = vmatprep.subr.bf16.mxu0 0
    %66 = vmatpush1.bf16.msra.mxu0 0
    %67 = vmatprep.subr.bf16.mxu0 0
    %68 = vmatpush1.bf16.msra.mxu0 0
    %69 = vmatprep.subr.bf16.mxu0 0
    %70 = vmatpush1.bf16.msra.mxu0 0
    %71 = vmatprep.subr.bf16.mxu0 0
    %72 = vmatpush1.bf16.msra.mxu0 0
    %73 = vmatprep.subr.bf16.mxu0 0
    %74 = vmatpush1.bf16.msra.mxu0 0
    %75 = vmatprep.subr.bf16.mxu0 0
    %76 = vmatpush1.bf16.msra.mxu0 0
    %77 = vmatprep.subr.bf16.mxu0 0
    %78 = vmatpush1.bf16.msra.mxu0 0
    %79 = vmatprep.subr.bf16.mxu0 0
    %80 = vmatpush1.bf16.msra.mxu0 0
    %81 = vmatprep.subr.bf16.mxu0 0
    %82 = vmatpush1.bf16.msra.mxu0 0
    %83 = vmatprep.mubr.bf16.mxu0 0
    %84 = vmatmul.mubr.bf16.gmra.mrb[0].mxu0 %v49
    %v85 = vpop.f32.mrb[0].mxu0
    %v86 = vadd.f32 %v45, %v85
    %v87 = vpop.f32.mrb[0].mxu0
    %v88 = vpop.f32.mrb[0].mxu0
    %v89 = vpop.f32.mrb[0].mxu0
    %90 = vdwg.mxu0
    %v91 = vmax.f32 %v86, 0.0
    %v92 = vld [vmem:[%s3] sm:$0xf]
    %v93 = vld [vmem:[%s3 + $0x4] sm:$0xf]
    %v94 = vpack.c.bf16 %v91, %v91
    %v95 = vld [vmem:[%s4] sm:$0xff]
    %v96 = vld [vmem:[%s4 + $0x8] sm:$0xff]
    %98 = vset.pattern.permute.xlu0 0
    %99 = vperm.xlu0 %98, %v95
    %v100 = vpop.permute.xlu0 %99
    %103 = vset.pattern.permute.xlu0 0
    %104 = vperm.xlu0 %103, %v96
    %v105 = vpop.permute.xlu0 %104
    %v109 = vunpack.c.l.b16 %v92
    %v110 = vunpack.c.l.b16 %v93
    %v111 = vpack.c.b16 %v110, %v109
    %vm112 = vcmask 64512
    %v114 = vsel %vm112, %v111, 0
    %vm116 = vcmask 1043456
    %v118 = vsel %vm116, %v94, 0
    %120 = vmatprep.subr.bf16.mxu0 0
    %121 = vmatpush1.bf16.msra.mxu0 %v118
    %122 = vmatprep.subr.bf16.mxu0 0
    %123 = vmatpush1.bf16.msra.mxu0 0
    %124 = vmatprep.subr.bf16.mxu0 0
    %125 = vmatpush1.bf16.msra.mxu0 0
    %126 = vmatprep.subr.bf16.mxu0 0
    %127 = vmatpush1.bf16.msra.mxu0 0
    %128 = vmatprep.subr.bf16.mxu0 0
    %129 = vmatpush1.bf16.msra.mxu0 0
    %130 = vmatprep.subr.bf16.mxu0 0
    %131 = vmatpush1.bf16.msra.mxu0 0
    %132 = vmatprep.subr.bf16.mxu0 0
    %133 = vmatpush1.bf16.msra.mxu0 0
    %134 = vmatprep.subr.bf16.mxu0 0
    %135 = vmatpush1.bf16.msra.mxu0 0
    %136 = vmatprep.subr.bf16.mxu0 0
    %137 = vmatpush1.bf16.msra.mxu0 0
    %138 = vmatprep.subr.bf16.mxu0 0
    %139 = vmatpush1.bf16.msra.mxu0 0
    %140 = vmatprep.subr.bf16.mxu0 0
    %141 = vmatpush1.bf16.msra.mxu0 0
    %142 = vmatprep.subr.bf16.mxu0 0
    %143 = vmatpush1.bf16.msra.mxu0 0
    %144 = vmatprep.subr.bf16.mxu0 0
    %145 = vmatpush1.bf16.msra.mxu0 0
    %146 = vmatprep.subr.bf16.mxu0 0
    %147 = vmatpush1.bf16.msra.mxu0 0
    %148 = vmatprep.subr.bf16.mxu0 0
    %149 = vmatpush1.bf16.msra.mxu0 0
    %150 = vmatprep.subr.bf16.mxu0 0
    %151 = vmatpush1.bf16.msra.mxu0 0
    %152 = vmatprep.mubr.bf16.mxu0 0
    %153 = vmatmul.mubr.bf16.gmra.mrb[0].mxu0 %v114
    %v154 = vpop.f32.mrb[0].mxu0
    %v155 = vadd.f32 %v100, %v154
    %v156 = vpop.f32.mrb[0].mxu0
    %v157 = vpop.f32.mrb[0].mxu0
    %v158 = vadd.f32 %v105, %v157
    %v159 = vpop.f32.mrb[0].mxu0
    %160 = vdwg.mxu0
    %v161 = vmax.f32 %v155, 0.0
    %v162 = vmax.f32 %v158, 0.0
    %v163 = vld [vmem:[%s5] sm:$0xf]
    %v164 = vld [vmem:[%s5 + $0x4] sm:$0xf]
    %v165 = vld [vmem:[%s5 + $0x8] sm:$0xf]
    %v166 = vld [vmem:[%s5 + $0xc] sm:$0xf]
    %v167 = vpack.c.bf16 %v162, %v161
    %v168 = vld [vmem:[%s6] sm:$0xff]
    %v169 = vld [vmem:[%s6 + $0x8] sm:$0xff]
    %v170 = vld [vmem:[%s6 + $0x10] sm:$0xff]
    %v171 = vld [vmem:[%s6 + $0x18] sm:$0xff]
    %173 = vset.pattern.permute.xlu0 0
    %174 = vperm.xlu0 %173, %v168
    %v175 = vpop.permute.xlu0 %174
    %178 = vset.pattern.permute.xlu0 0
    %179 = vperm.xlu0 %178, %v169
    %v180 = vpop.permute.xlu0 %179
    %183 = vset.pattern.permute.xlu0 0
    %184 = vperm.xlu0 %183, %v170
    %v185 = vpop.permute.xlu0 %184
    %188 = vset.pattern.permute.xlu0 0
    %189 = vperm.xlu0 %188, %v171
    %v190 = vpop.permute.xlu0 %189
    %v196 = vunpack.c.l.b16 %v163
    %v197 = vunpack.c.l.b16 %v164
    %v198 = vunpack.c.l.b16 %v165
    %v199 = vunpack.c.l.b16 %v166
    %v200 = vpack.c.b16 %v197, %v196
    %v201 = vpack.c.b16 %v199, %v198
    %vm202 = vcmask 130048
    %v204 = vsel %vm202, %v200, 0
    %v207 = vsel %vm202, %v201, 0
    %209 = vmatprep.subr.bf16.mxu0 0
    %210 = vmatpush1.bf16.msra.mxu0 %v167
    %211 = vmatprep.subr.bf16.mxu0 0
    %212 = vmatpush1.bf16.msra.mxu0 0
    %213 = vmatprep.subr.bf16.mxu0 0
    %214 = vmatpush1.bf16.msra.mxu0 0
    %215 = vmatprep.subr.bf16.mxu0 0
    %216 = vmatpush1.bf16.msra.mxu0 0
    %217 = vmatprep.subr.bf16.mxu0 0
    %218 = vmatpush1.bf16.msra.mxu0 0
    %219 = vmatprep.subr.bf16.mxu0 0
    %220 = vmatpush1.bf16.msra.mxu0 0
    %221 = vmatprep.subr.bf16.mxu0 0
    %222 = vmatpush1.bf16.msra.mxu0 0
    %223 = vmatprep.subr.bf16.mxu0 0
    %224 = vmatpush1.bf16.msra.mxu0 0
    %225 = vmatprep.subr.bf16.mxu0 0
    %226 = vmatpush1.bf16.msra.mxu0 0
    %227 = vmatprep.subr.bf16.mxu0 0
    %228 = vmatpush1.bf16.msra.mxu0 0
    %229 = vmatprep.subr.bf16.mxu0 0
    %230 = vmatpush1.bf16.msra.mxu0 0
    %231 = vmatprep.subr.bf16.mxu0 0
    %232 = vmatpush1.bf16.msra.mxu0 0
    %233 = vmatprep.subr.bf16.mxu0 0
    %234 = vmatpush1.bf16.msra.mxu0 0
    %235 = vmatprep.subr.bf16.mxu0 0
    %236 = vmatpush1.bf16.msra.mxu0 0
    %237 = vmatprep.subr.bf16.mxu0 0
    %238 = vmatpush1.bf16.msra.mxu0 0
    %239 = vmatprep.subr.bf16.mxu0 0
    %240 = vmatpush1.bf16.msra.mxu0 0
    %241 = vmatprep.mubr.bf16.mxu0 0
    %242 = vmatmul.mubr.bf16.gmra.mrb[0].mxu0 %v204
    %v243 = vpop.f32.mrb[0].mxu0
    %v244 = vadd.f32 %v175, %v243
    %v245 = vpop.f32.mrb[0].mxu0
    %v246 = vpop.f32.mrb[0].mxu0
    %v247 = vadd.f32 %v180, %v246
    %v248 = vpop.f32.mrb[0].mxu0
    %249 = vmatprep.mubr.bf16.mxu0 0
    %250 = vmatmul.mubr.bf16.gmra.mrb[0].mxu0 %v207
    %v251 = vpop.f32.mrb[0].mxu0
    %v252 = vadd.f32 %v185, %v251
    %v253 = vpop.f32.mrb[0].mxu0
    %v254 = vpop.f32.mrb[0].mxu0
    %v255 = vadd.f32 %v190, %v254
    %v256 = vpop.f32.mrb[0].mxu0
    %257 = vdwg.mxu0
    %v258 = vmax.f32 %v244, 0.0
    %v259 = vmax.f32 %v247, 0.0
    %v260 = vmax.f32 %v252, 0.0
    %v261 = vmax.f32 %v255, 0.0
    %v262 = vld [vmem:[%s7] sm:$0xf]
    %v263 = vld [vmem:[%s7 + $0x4] sm:$0x1]
    %v264 = vpack.c.bf16 %v259, %v258
    %v265 = vpack.c.bf16 %v261, %v260
    %v266 = vld [vmem:[%s8] sm:$0xff]
    %v267 = vld [vmem:[%s8 + $0x8] sm:$0x3]
    %269 = vset.pattern.permute.xlu0 0
    %270 = vperm.xlu0 %269, %v266
    %v271 = vpop.permute.xlu0 %270
    %274 = vset.pattern.permute.xlu0 0
    %275 = vperm.xlu0 %274, %v267
    %v276 = vpop.permute.xlu0 %275
    %v280 = vunpack.c.l.b16 %v262
    %v281 = vunpack.c.l.b16 %v263
    %v282 = vpack.c.b16 %v281, %v280
    %v284 = vsel %vm47, %v282, 0
    %286 = vmatprep.subr.bf16.mxu0 0
    %287 = vmatpush1.bf16.msra.mxu0 %v264
    %288 = vmatprep.subr.bf16.mxu0 0
    %289 = vmatpush1.bf16.msra.mxu0 %v265
    %290 = vmatprep.subr.bf16.mxu0 0
    %291 = vmatpush1.bf16.msra.mxu0 0
    %292 = vmatprep.subr.bf16.mxu0 0
    %293 = vmatpush1.bf16.msra.mxu0 0
    %294 = vmatprep.subr.bf16.mxu0 0
    %295 = vmatpush1.bf16.msra.mxu0 0
    %296 = vmatprep.subr.bf16.mxu0 0
    %297 = vmatpush1.bf16.msra.mxu0 0
    %298 = vmatprep.subr.bf16.mxu0 0
    %299 = vmatpush1.bf16.msra.mxu0 0
    %300 = vmatprep.subr.bf16.mxu0 0
    %301 = vmatpush1.bf16.msra.mxu0 0
    %302 = vmatprep.subr.bf16.mxu0 0
    %303 = vmatpush1.bf16.msra.mxu0 0
    %304 = vmatprep.subr.bf16.mxu0 0
    %305 = vmatpush1.bf16.msra.mxu0 0
    %306 = vmatprep.subr.bf16.mxu0 0
    %307 = vmatpush1.bf16.msra.mxu0 0
    %308 = vmatprep.subr.bf16.mxu0 0
    %309 = vmatpush1.bf16.msra.mxu0 0
    %310 = vmatprep.subr.bf16.mxu0 0
    %311 = vmatpush1.bf16.msra.mxu0 0
    %312 = vmatprep.subr.bf16.mxu0 0
    %313 = vmatpush1.bf16.msra.mxu0 0
    %314 = vmatprep.subr.bf16.mxu0 0
    %315 = vmatpush1.bf16.msra.mxu0 0
    %316 = vmatprep.subr.bf16.mxu0 0
    %317 = vmatpush1.bf16.msra.mxu0 0
    %318 = vmatprep.mubr.bf16.mxu0 0
    %319 = vmatmul.mubr.bf16.gmra.mrb[0].mxu0 %v284
    %v320 = vpop.f32.mrb[0].mxu0
    %v321 = vadd.f32 %v271, %v320
    %v322 = vpop.f32.mrb[0].mxu0
    %v323 = vpop.f32.mrb[0].mxu0
    %v324 = vadd.f32 %v276, %v323
    %v325 = vpop.f32.mrb[0].mxu0
    %326 = vdwg.mxu0
    %327 = vst [vmem:[#allocation2] sm:$0xff] %v321
    %328 = vst [vmem:[#allocation2 + $0x8] sm:$0x3] %v324
    // Predicated region
    $region38: #{tpu_custom_call.1} parent=1 // pred_check
      _
    $region39: #{tpu_custom_call.1} parent=1 // pred_check_branch
      %330 = sbr.rel (0) target = $region41
    $region40: #{tpu_custom_call.1} parent=1 // pred_region
      %s332 = ssub.s32 256, 256
      %333 = vsyncadd [#allocation3], %s332
      %s334 = sshll.u32 [#allocation2], 4
      %s335 = int_to_ptr.vmem [resolvable:$true] %s334
      %340 = dma.vmem_to_hbm [thread:$0]  %s335, 256, %s9, [#allocation3], 128, 128, 8
    $region41: #{tpu_custom_call.1} parent=1 // pred_fallthru
      _
    // Predicated region
    $region42: #{tpu_custom_call.1} parent=1 // pred_check
      _
    $region43: #{tpu_custom_call.1} parent=1 // pred_check_branch
      %342 = sbr.rel (0) target = $region45
    $region44: #{tpu_custom_call.1} parent=1 // pred_region
      %343 = dma.done [#allocation3], 256
    $region45: #{tpu_custom_call.1} parent=1 // pred_fallthru
      _
    %344 = vsyncpa [#allocation3], 1

</llo_original>
